<compile_context>
chip_gen: v7x
topology: tpu7x:2x2x1
jax: 0.10.0
libtpu: 0.0.40
codegen_flags: <defaults>
</compile_context>

<pallas_src>
import functools

import jax
import jax.numpy as jnp
from jax.experimental import pallas as pl
from jax.experimental.pallas import tpu as pltpu

ALPHA = 0.25    # focal alpha (FocalLoss default)
GAMMA = 2.0     # focal gamma (compile-time 2 -> explicit square in the kernel)

LANE = 128      # lane width (last dim of every block)
MAX_BM = 4096   # max rows/block: 4096*128*4B = 2 MiB per f32 input block


def _cdiv(a, b):
    return -(-a // b)


def _num_tensorcores():
    """2 TensorCores per chip on v7x; 1 on v5e/v6e (heuristic on device_kind)."""
    try:
        kind = jax.devices()[0].device_kind.lower()
    except Exception:
        return 1
    return 2 if ("v7" in kind or "tpu7" in kind) else 1


def _focal_kernel(x_ref, t_ref, acc_ref, *, bm, blocks_per_core, full_rows,
                  rem_lanes, falpha):
    """Accumulate per-core partial focal-loss sums into a resident (1,8,128) block."""
    c = pl.program_id(0)   # core axis (CORE_PARALLEL on 2-TC chips)
    j = pl.program_id(1)   # reduction axis over row-blocks

    @pl.when(j == 0)
    def _():
        acc_ref[...] = jnp.zeros_like(acc_ref)

    x = x_ref[...].astype(jnp.float32)
    t = t_ref[...].astype(jnp.float32)

    # Stable BCE-with-logits using one sigmoid + one log (2 EUP ops/element):
    #   sig_abs = sigmoid(|x|);  log1p(exp(-|x|)) = -log(sig_abs)
    #   bce     = max(x,0) - x*t - log(sig_abs)
    #   pt      = exp(-bce) = sigmoid(x) if t==1 else 1-sigmoid(x)   (t in {0,1})
    sig_abs = jax.nn.sigmoid(jnp.abs(x))
    log_sig_abs = jnp.log(sig_abs)
    bce = jnp.maximum(x, 0.0) - x * t - log_sig_abs
    sig = jnp.where(x >= 0.0, sig_abs, 1.0 - sig_abs)
    pt = jnp.where(t > 0.5, sig, 1.0 - sig)

    at = jnp.where(t > 0.5, 1.0 - falpha, falpha)
    one_m_pt = 1.0 - pt
    term = at * (one_m_pt * one_m_pt) * bce          # gamma == 2 -> explicit square

    def accumulate(vals):
        # VPU-only partial reduction: (bm,128) -> (8,128).  The single
        # cross-lane sum happens once, outside the kernel.
        partial = jnp.sum(vals.reshape(bm // 8, 8, LANE), axis=0)
        acc_ref[...] += partial.reshape(1, 8, LANE)

    # Tail-only masking: full blocks skip all mask math (iota/compare/select).
    blk = c * blocks_per_core + j          # logical (unclamped) block index
    row0 = blk * bm
    is_tail = row0 + bm > full_rows        # block touches padded / invalid rows

    @pl.when(jnp.logical_not(is_tail))
    def _():
        accumulate(term)

    @pl.when(is_tail)
    def _():
        # Row/lane compare (no flat int32 element index -> no overflow).
        rows = row0 + jax.lax.broadcasted_iota(jnp.int32, (bm, LANE), 0)
        lanes = jax.lax.broadcasted_iota(jnp.int32, (bm, LANE), 1)
        valid = (rows < full_rows) | ((rows == full_rows) & (lanes < rem_lanes))
        accumulate(jnp.where(valid, term, 0.0))


def focal_loss(inputs, targets, alpha=ALPHA):
    """FocalLoss.forward (gamma=2, weight=None) for arbitrary-shaped inputs/targets."""
    n = inputs.size
    if n == 0:
        return jnp.full((), jnp.nan, jnp.float32)    # torch mean of empty -> nan
    x = inputs.reshape(-1)
    t = targets.reshape(-1)

    # Sublane multiple so the block satisfies the narrowest input's minimum
    # tile: f32 -> 8, bf16 -> 16, int8/bool -> 32.
    mult = max(8, 32 // min(x.dtype.itemsize, t.dtype.itemsize))

    m = _cdiv(n, LANE)                 # rows needed for the (rows, 128) view
    m_arr = max(m, mult)               # tiny inputs: round up to one legal block
    n_arr = m_arr * LANE
    if n_arr != n:
        # Ragged lane tail and/or tiny input: small flat pad (rare path).  The
        # common n % 128 == 0 case takes the pad-free path (free reshape).
        x = jnp.pad(x, (0, n_arr - n))
        t = jnp.pad(t, (0, n_arr - n))
    x2 = x.reshape(m_arr, LANE)
    t2 = t.reshape(m_arr, LANE)

    # Large lane-dense blocks; bm <= m_arr so every block starts in bounds
    # (the last block may be partial -> masked in-kernel).
    bm = min(MAX_BM, (m_arr // mult) * mult)
    nblocks = _cdiv(m_arr, bm)

    ncores = min(_num_tensorcores(), nblocks)
    blocks_per_core = _cdiv(nblocks, ncores)

    if ncores * blocks_per_core == nblocks:
        in_index = lambda c, j: (c * blocks_per_core + j, 0)
    else:
        # Odd block count on 2 cores: point the phantom trailing step at the
        # last real block; its contribution is masked to zero in-kernel.
        last = nblocks - 1
        in_index = lambda c, j: (jnp.minimum(c * blocks_per_core + j, last), 0)

    kernel = functools.partial(
        _focal_kernel, bm=bm, blocks_per_core=blocks_per_core,
        full_rows=n // LANE, rem_lanes=n % LANE, falpha=float(alpha))

    bytes_in = x2.size * x2.dtype.itemsize + t2.size * t2.dtype.itemsize

    def run(dim_sem):
        return pl.pallas_call(
            kernel,
            out_shape=jax.ShapeDtypeStruct((ncores, 8, LANE), jnp.float32),
            grid_spec=pltpu.PrefetchScalarGridSpec(
                num_scalar_prefetch=0,
                grid=(ncores, blocks_per_core),
                in_specs=[
                    pl.BlockSpec((bm, LANE), in_index),
                    pl.BlockSpec((bm, LANE), in_index),
                ],
                out_specs=pl.BlockSpec((1, 8, LANE), lambda c, j: (c, 0, 0)),
            ),
            compiler_params=pltpu.CompilerParams(dimension_semantics=dim_sem),
            cost_estimate=pl.CostEstimate(
                flops=15 * n_arr,
                transcendentals=2 * n_arr,
                bytes_accessed=int(bytes_in) + ncores * 8 * LANE * 4,
            ),
        )(x2, t2)

    if ncores > 1:
        # v7x: split the c axis across both TensorCores.  Fall back to plain
        # "parallel" semantics if CORE_PARALLEL is rejected (eager call, so
        # the compile error is catchable here).
        try:
            partials = run((pltpu.CORE_PARALLEL, pltpu.ARBITRARY))
        except Exception:
            partials = run(("parallel", "arbitrary"))
    else:
        partials = run(("arbitrary", "arbitrary"))

    # Cheap scalar glue: one cross-lane reduction + the mean's 1/N.
    return jnp.sum(partials) / n


def _reference(inputs, targets, alpha=ALPHA, gamma=GAMMA):
    # Pure-JAX mirror of the PyTorch FocalLoss.forward (elementwise `at`).
    x = inputs.reshape(-1).astype(jnp.float32)
    t = targets.reshape(-1).astype(jnp.float32)
    bce = jnp.maximum(x, 0.0) - x * t + jnp.log1p(jnp.exp(-jnp.abs(x)))
    pt = jnp.exp(-bce)
    at = jnp.where(t > 0.5, 1.0 - alpha, alpha)
    return jnp.mean(at * (1.0 - pt) ** gamma * bce)


if __name__ == "__main__":
    key = jax.random.PRNGKey(0)
    kx, kt, kx2, kt2 = jax.random.split(key, 4)

    # NCHW: batch=2, channels=4, spatial=16x16 (128-aligned -> pad-free path).
    x = jax.random.normal(kx, (2, 4, 16, 16), dtype=jnp.float32)
    t = jax.random.bernoulli(kt, p=0.3, shape=(2, 4, 16, 16)).astype(jnp.float32)
    loss = focal_loss(x, t)
    jax.block_until_ready(loss)
    ref = _reference(x, t)
    assert jnp.allclose(loss, ref, rtol=1e-5, atol=1e-5), (loss, ref)

    # Ragged shape (exercises the small-pad + tail-mask path).
    xr = jax.random.normal(kx2, (2, 3, 9, 9), dtype=jnp.float32)
    tr = jax.random.bernoulli(kt2, p=0.3, shape=(2, 3, 9, 9)).astype(jnp.float32)
    loss_r = focal_loss(xr, tr)
    jax.block_until_ready(loss_r)
    ref_r = _reference(xr, tr)
    assert jnp.allclose(loss_r, ref_r, rtol=1e-5, atol=1e-5), (loss_r, ref_r)

    print("KERNEL_OK")
</pallas_src>

<mosaic_0001>
module attributes {stable_mosaic.version = 11 : i64} {
  func.func @_focal_kernel(%arg0: i32, %arg1: i32, %arg2: memref<16x128xf32, #tpu.memory_space<vmem>>, %arg3: memref<16x128xf32, #tpu.memory_space<vmem>>, %arg4: memref<1x8x128xf32, #tpu.memory_space<vmem>>) attributes {dimension_semantics = [#tpu.dimension_semantics<arbitrary>, #tpu.dimension_semantics<arbitrary>], iteration_bounds = array<i64: 1, 1>, scalar_prefetch = 0 : i64, scratch_operands = 0 : i64, tpu.core_type = #tpu.core_type<tc>, window_params = [{transform_indices = @transform_0, window_bounds = array<i64: 16, 128>}, {transform_indices = @transform_1, window_bounds = array<i64: 16, 128>}, {transform_indices = @transform_2, window_bounds = array<i64: 1, 8, 128>}]} {
    %c0_i32 = arith.constant 0 : i32
    %0 = arith.cmpi eq, %arg1, %c0_i32 : i32
    %1 = arith.extui %0 : i1 to i32
    %c0_i32_0 = arith.constant 0 : i32
    %2 = arith.cmpi ne, %1, %c0_i32_0 : i32
    scf.if %2 {
      %cst_17 = arith.constant 0.000000e+00 : f32
      %47 = vector.broadcast %cst_17 : f32 to vector<1x8x128xf32>
      %c0_18 = arith.constant 0 : index
      %c0_19 = arith.constant 0 : index
      %c0_20 = arith.constant 0 : index
      %48 = vector.load %arg4[%c0_18, %c0_19, %c0_20] : memref<1x8x128xf32, #tpu.memory_space<vmem>>, vector<1x8x128xf32>
      tpu.vector_store %arg4[%c0_18, %c0_19, %c0_20], %47 {strides = array<i32>} : memref<1x8x128xf32, #tpu.memory_space<vmem>>, vector<1x8x128xf32>,
    } else {
    }
    %c0 = arith.constant 0 : index
    %c0_1 = arith.constant 0 : index
    %3 = vector.load %arg2[%c0, %c0_1] : memref<16x128xf32, #tpu.memory_space<vmem>>, vector<16x128xf32>
    %c0_2 = arith.constant 0 : index
    %c0_3 = arith.constant 0 : index
    %4 = vector.load %arg3[%c0_2, %c0_3] : memref<16x128xf32, #tpu.memory_space<vmem>>, vector<16x128xf32>
    %5 = math.absf %3 : vector<16x128xf32>
    %6 = arith.negf %5 : vector<16x128xf32>
    %7 = math.exp %6 : vector<16x128xf32>
    %cst = arith.constant 1.000000e+00 : f32
    %8 = vector.broadcast %cst : f32 to vector<16x128xf32>
    %9 = arith.addf %8, %7 : vector<16x128xf32>
    %10 = arith.divf %8, %9 : vector<16x128xf32>
    %11 = math.log %10 : vector<16x128xf32>
    %cst_4 = arith.constant 0.000000e+00 : f32
    %12 = vector.broadcast %cst_4 : f32 to vector<16x128xf32>
    %13 = arith.maximumf %3, %12 : vector<16x128xf32>
    %14 = arith.mulf %3, %4 : vector<16x128xf32>
    %15 = arith.subf %13, %14 : vector<16x128xf32>
    %16 = arith.subf %15, %11 : vector<16x128xf32>
    %cst_5 = arith.constant 0.000000e+00 : f32
    %17 = vector.broadcast %cst_5 : f32 to vector<16x128xf32>
    %18 = arith.cmpf oge, %3, %17 : vector<16x128xf32>
    %cst_6 = arith.constant 1.000000e+00 : f32
    %19 = vector.broadcast %cst_6 : f32 to vector<16x128xf32>
    %20 = arith.subf %19, %10 : vector<16x128xf32>
    %21 = arith.select %18, %10, %20 : vector<16x128xi1>, vector<16x128xf32>
    %cst_7 = arith.constant 5.000000e-01 : f32
    %22 = vector.broadcast %cst_7 : f32 to vector<16x128xf32>
    %23 = arith.cmpf ogt, %4, %22 : vector<16x128xf32>
    %cst_8 = arith.constant 1.000000e+00 : f32
    %24 = vector.broadcast %cst_8 : f32 to vector<16x128xf32>
    %25 = arith.subf %24, %21 : vector<16x128xf32>
    %26 = arith.select %23, %21, %25 : vector<16x128xi1>, vector<16x128xf32>
    %cst_9 = arith.constant 5.000000e-01 : f32
    %27 = vector.broadcast %cst_9 : f32 to vector<16x128xf32>
    %28 = arith.cmpf ogt, %4, %27 : vector<16x128xf32>
    %cst_10 = arith.constant 7.500000e-01 : f32
    %cst_11 = arith.constant 2.500000e-01 : f32
    %29 = vector.broadcast %cst_10 : f32 to vector<16x128xf32>
    %30 = vector.broadcast %cst_11 : f32 to vector<16x128xf32>
    %31 = arith.select %28, %29, %30 : vector<16x128xi1>, vector<16x128xf32>
    %cst_12 = arith.constant 1.000000e+00 : f32
    %32 = vector.broadcast %cst_12 : f32 to vector<16x128xf32>
    %33 = arith.subf %32, %26 : vector<16x128xf32>
    %34 = arith.mulf %33, %33 : vector<16x128xf32>
    %35 = arith.mulf %31, %34 : vector<16x128xf32>
    %36 = arith.mulf %35, %16 : vector<16x128xf32>
    %c1_i32 = arith.constant 1 : i32
    %37 = arith.muli %arg0, %c1_i32 : i32
    %38 = arith.addi %37, %arg1 : i32
    %c16_i32 = arith.constant 16 : i32
    %39 = arith.muli %38, %c16_i32 : i32
    %c16_i32_13 = arith.constant 16 : i32
    %40 = arith.addi %39, %c16_i32_13 : i32
    %c16_i32_14 = arith.constant 16 : i32
    %41 = arith.cmpi sgt, %40, %c16_i32_14 : i32
    %true = arith.constant true
    %42 = arith.xori %41, %true : i1
    %43 = arith.extui %42 : i1 to i32
    %c0_i32_15 = arith.constant 0 : i32
    %44 = arith.cmpi ne, %43, %c0_i32_15 : i32
    scf.if %44 {
      %47 = vector.shape_cast %36 : vector<16x128xf32> to vector<2x8x128xf32>
      %cst_17 = arith.constant dense<0.000000e+00> : vector<8x128xf32>
      %48 = vector.multi_reduction <add>, %47, %cst_17 [0] : vector<2x8x128xf32> to vector<8x128xf32>
      %c0_18 = arith.constant 0 : index
      %c0_19 = arith.constant 0 : index
      %c0_20 = arith.constant 0 : index
      %49 = vector.load %arg4[%c0_18, %c0_19, %c0_20] : memref<1x8x128xf32, #tpu.memory_space<vmem>>, vector<1x8x128xf32>
      %50 = vector.shape_cast %48 : vector<8x128xf32> to vector<1x8x128xf32>
      %51 = arith.addf %49, %50 : vector<1x8x128xf32>
      %c0_21 = arith.constant 0 : index
      %c0_22 = arith.constant 0 : index
      %c0_23 = arith.constant 0 : index
      %52 = vector.load %arg4[%c0_21, %c0_22, %c0_23] : memref<1x8x128xf32, #tpu.memory_space<vmem>>, vector<1x8x128xf32>
      tpu.vector_store %arg4[%c0_21, %c0_22, %c0_23], %51 {strides = array<i32>} : memref<1x8x128xf32, #tpu.memory_space<vmem>>, vector<1x8x128xf32>,
    } else {
    }
    %45 = arith.extui %41 : i1 to i32
    %c0_i32_16 = arith.constant 0 : i32
    %46 = arith.cmpi ne, %45, %c0_i32_16 : i32
    scf.if %46 {
      %47 = tpu.iota {dimensions = array<i32: 0>} : vector<16x128xi32>
      %48 = vector.broadcast %39 : i32 to vector<16x128xi32>
      %49 = arith.addi %48, %47 : vector<16x128xi32>
      %50 = tpu.iota {dimensions = array<i32: 1>} : vector<16x128xi32>
      %c16_i32_17 = arith.constant 16 : i32
      %51 = vector.broadcast %c16_i32_17 : i32 to vector<16x128xi32>
      %52 = arith.cmpi slt, %49, %51 : vector<16x128xi32>
      %c16_i32_18 = arith.constant 16 : i32
      %53 = vector.broadcast %c16_i32_18 : i32 to vector<16x128xi32>
      %54 = arith.cmpi eq, %49, %53 : vector<16x128xi32>
      %c0_i32_19 = arith.constant 0 : i32
      %55 = vector.broadcast %c0_i32_19 : i32 to vector<16x128xi32>
      %56 = arith.cmpi slt, %50, %55 : vector<16x128xi32>
      %57 = arith.andi %54, %56 : vector<16x128xi1>
      %58 = arith.ori %52, %57 : vector<16x128xi1>
      %cst_20 = arith.constant 0.000000e+00 : f32
      %59 = vector.broadcast %cst_20 : f32 to vector<16x128xf32>
      %60 = arith.select %58, %36, %59 : vector<16x128xi1>, vector<16x128xf32>
      %61 = vector.shape_cast %60 : vector<16x128xf32> to vector<2x8x128xf32>
      %cst_21 = arith.constant dense<0.000000e+00> : vector<8x128xf32>
      %62 = vector.multi_reduction <add>, %61, %cst_21 [0] : vector<2x8x128xf32> to vector<8x128xf32>
      %c0_22 = arith.constant 0 : index
      %c0_23 = arith.constant 0 : index
      %c0_24 = arith.constant 0 : index
      %63 = vector.load %arg4[%c0_22, %c0_23, %c0_24] : memref<1x8x128xf32, #tpu.memory_space<vmem>>, vector<1x8x128xf32>
      %64 = vector.shape_cast %62 : vector<8x128xf32> to vector<1x8x128xf32>
      %65 = arith.addf %63, %64 : vector<1x8x128xf32>
      %c0_25 = arith.constant 0 : index
      %c0_26 = arith.constant 0 : index
      %c0_27 = arith.constant 0 : index
      %66 = vector.load %arg4[%c0_25, %c0_26, %c0_27] : memref<1x8x128xf32, #tpu.memory_space<vmem>>, vector<1x8x128xf32>
      tpu.vector_store %arg4[%c0_25, %c0_26, %c0_27], %65 {strides = array<i32>} : memref<1x8x128xf32, #tpu.memory_space<vmem>>, vector<1x8x128xf32>,
    } else {
    }
    return
  }
  func.func @transform_0(%arg0: i32, %arg1: i32) -> (i32, i32) {
    %c1_i32 = arith.constant 1 : i32
    %0 = arith.muli %arg0, %c1_i32 : i32
    %1 = arith.addi %0, %arg1 : i32
    %c0_i32 = arith.constant 0 : i32
    %c0_i32_0 = arith.constant 0 : i32
    return %1, %c0_i32 : i32, i32
  }
  func.func @transform_1(%arg0: i32, %arg1: i32) -> (i32, i32) {
    %c1_i32 = arith.constant 1 : i32
    %0 = arith.muli %arg0, %c1_i32 : i32
    %1 = arith.addi %0, %arg1 : i32
    %c0_i32 = arith.constant 0 : i32
    %c0_i32_0 = arith.constant 0 : i32
    return %1, %c0_i32 : i32, i32
  }
  func.func @transform_2(%arg0: i32, %arg1: i32) -> (i32, i32, i32) {
    %c0_i32 = arith.constant 0 : i32
    %c0_i32_0 = arith.constant 0 : i32
    %c0_i32_1 = arith.constant 0 : i32
    return %arg0, %c0_i32, %c0_i32_0 : i32, i32, i32
  }
}

</mosaic_0001>

<llo_original>
// kernel: tpu_custom_call.1
$region0: #{tpu_custom_call.1}
  #allocation0 [shape = 'u32[]', space=smem, size = 0x4, offset = 0x4, fixed_abs, tag = 'smem constant byte address 0x4 - core index']
  #allocation1 [shape = 'u32[144,128]{1,0:T(1,128)}', space=vmem, size = 0x12000, scoped, tag = 'internal scratch']
  %s0 = inlined_call_operand.hbm [shape: f32[16,128], index: 0, kind: input, shape index: {}]
  %s1 = inlined_call_operand.hbm [shape: f32[16,128], index: 1, kind: input, shape index: {}]
  %s2 = inlined_call_operand.hbm [shape: f32[1,8,128], index: 2, kind: output, shape index: {}]
  %s3 = sld [smem:[#allocation0]]
  $region38: #{tpu_custom_call.1} parent=0
    _
  %s5 = ssub.s32 1, %s3
  %s6 = scalar_select 0, %s5, %s3
  $region1: #{tpu_custom_call.1} parent=0
    #allocation2 [shape = 'u8[8192]{0}', space=vmem, size = 0x2000, scoped, tag = 'input window, operand 0, single buffered']
    #allocation3 [shape = 's32[1]{0}', space=sflag, size = 0x4, scoped, tag = 'scoped memory for tpu_custom_call.1']
    #allocation4 [shape = 's32[1]{0}', space=sflag, size = 0x4, scoped, tag = 'scoped memory for tpu_custom_call.1']
    #allocation5 [shape = 'u8[8192]{0}', space=vmem, size = 0x2000, scoped, tag = 'input window, operand 1, single buffered']
    #allocation6 [shape = 's32[1]{0}', space=sflag, size = 0x4, scoped, tag = 'scoped memory for tpu_custom_call.1']
    #allocation7 [shape = 'u8[4096]{0}', space=vmem, size = 0x1000, scoped, tag = 'output window, operand 0, single buffered']
    %7 = vsyncpa [#allocation3], 0
    %8 = vsyncpa [#allocation6], 0
    %9 = vsyncpa [#allocation4], 0
    // Predicated region
    $region2: #{tpu_custom_call.1} parent=1 // pred_check
      _
    $region3: #{tpu_custom_call.1} parent=1 // pred_check_branch
      %11 = sbr.rel (0) target = $region5
    $region4: #{tpu_custom_call.1} parent=1 // pred_region
      %s12 = sadd.s32 0, 0
      %s13 = smul.u32 2, %s12
      %s15 = ssub.s32 256, 256
      %16 = vsyncadd [#allocation3], %s15
      %s17 = smul.addr %s13, 128
      %s18 = scalar_lea.hbm %s0, %s17
      %s19 = sshll.u32 [#allocation2], 4
      %s20 = int_to_ptr.vmem [resolvable:$true] %s19
      %25 = dma.hbm_to_vmem [thread:$0]  %s18, 256, %s20, [#allocation3], 128, 128, 8
    $region5: #{tpu_custom_call.1} parent=1 // pred_fallthru
      _
    // Predicated region
    $region6: #{tpu_custom_call.1} parent=1 // pred_check
      _
    $region7: #{tpu_custom_call.1} parent=1 // pred_check_branch
      %27 = sbr.rel (0) target = $region9
    $region8: #{tpu_custom_call.1} parent=1 // pred_region
      %s28 = sadd.s32 0, 0
      %s29 = smul.u32 2, %s28
      %s31 = ssub.s32 256, 256
      %32 = vsyncadd [#allocation6], %s31
      %s33 = smul.addr %s29, 128
      %s34 = scalar_lea.hbm %s1, %s33
      %s35 = sshll.u32 [#allocation5], 4
      %s36 = int_to_ptr.vmem [resolvable:$true] %s35
      %41 = dma.hbm_to_vmem [thread:$0]  %s34, 256, %s36, [#allocation6], 128, 128, 8
    $region9: #{tpu_custom_call.1} parent=1 // pred_fallthru
      _
    // Predicated region
    $region10: #{tpu_custom_call.1} parent=1 // pred_check
      _
    $region11: #{tpu_custom_call.1} parent=1 // pred_check_branch
      %43 = sbr.rel (0) target = $region13
    $region12: #{tpu_custom_call.1} parent=1 // pred_region
      %44 = dma.done [#allocation3], 256
    $region13: #{tpu_custom_call.1} parent=1 // pred_fallthru
      _
    // Predicated region
    $region14: #{tpu_custom_call.1} parent=1 // pred_check
      _
    $region15: #{tpu_custom_call.1} parent=1 // pred_check_branch
      %46 = sbr.rel (0) target = $region17
    $region16: #{tpu_custom_call.1} parent=1 // pred_region
      %47 = dma.done [#allocation6], 256
    $region17: #{tpu_custom_call.1} parent=1 // pred_fallthru
      _
    %s48 = sadd.s32 0, 0
    %s49 = smul.u32 2, %s48
    %s50 = sadd.s32 0, 0
    %s51 = smul.u32 2, %s50
    %p52 = scmp.eq.s32.totalorder 0, 0
    // Predicated region
    $region18: #{tpu_custom_call.1} parent=1 // pred_check
      %p53 = pneg %p52
    $region19: #{tpu_custom_call.1} parent=1 // pred_check_branch
      %55 = sbr.rel (%p53) target = $region21
    $region20: #{tpu_custom_call.1} parent=1 // pred_region
      %56 = vst [vmem:[#allocation7] sm:$0xff] 0.0
    $region21: #{tpu_custom_call.1} parent=1 // pred_fallthru
      _
    %v57 = vld [vmem:[#allocation2] sm:$0xff]
    %v58 = vld [vmem:[#allocation2 + $0x8] sm:$0xff]
    %v59 = vld [vmem:[#allocation5] sm:$0xff]
    %v60 = vld [vmem:[#allocation5 + $0x8] sm:$0xff]
    %v61 = vand.u32 2147483647, %v57
    %v62 = vand.u32 2147483647, %v58
    %v63 = vxor.u32 %v61, 2147483648
    %v64 = vxor.u32 %v62, 2147483648
    %v65 = vmul.f32 %v63, 1.442695
    %v66 = vpow.pop %v65
    %v67 = vmul.f32 %v64, 1.442695
    %v68 = vpow.pop %v67
    %v69 = vadd.f32 %v66, 1.0
    %v70 = vadd.f32 %v68, 1.0
    %v71 = vrcp.pop %v69
    %v72 = vmul.f32 1.0, %v71
    %v73 = vrcp.pop %v70
    %v74 = vmul.f32 1.0, %v73
    %v75 = vlog2.pop %v72
    %v76 = vmul.f32 %v75, 0.6931472
    %v77 = vlog2.pop %v74
    %v78 = vmul.f32 %v77, 0.6931472
    %v79 = vmax.f32 %v57, 0.0
    %v80 = vmax.f32 %v58, 0.0
    %v81 = vmul.f32 %v57, %v59
    %v82 = vmul.f32 %v58, %v60
    %v83 = vsub.f32 %v79, %v81
    %v84 = vsub.f32 %v80, %v82
    %v85 = vsub.f32 %v83, %v76
    %v86 = vsub.f32 %v84, %v78
    %vm87 = vcmp.ge.f32.partialorder %v57, 0.0
    %vm88 = vcmp.ge.f32.partialorder %v58, 0.0
    %v89 = vsub.f32 1.0, %v72
    %v90 = vsub.f32 1.0, %v74
    %v91 = vsel %vm87, %v72, %v89
    %v92 = vsel %vm88, %v74, %v90
    %vm93 = vcmp.gt.f32.partialorder %v59, 0.5
    %vm94 = vcmp.gt.f32.partialorder %v60, 0.5
    %v95 = vsub.f32 1.0, %v91
    %v96 = vsub.f32 1.0, %v92
    %v97 = vsel %vm93, %v91, %v95
    %v98 = vsel %vm94, %v92, %v96
    %v99 = vsel %vm93, 0.75, 0.25
    %v100 = vsel %vm94, 0.75, 0.25
    %v101 = vsub.f32 1.0, %v97
    %v102 = vsub.f32 1.0, %v98
    %v103 = vmul.f32 %v101, %v101
    %v104 = vmul.f32 %v102, %v102
    %v105 = vmul.f32 %v99, %v103
    %v106 = vmul.f32 %v100, %v104
    %v107 = vmul.f32 %v105, %v85
    %v108 = vmul.f32 %v106, %v86
    %s109 = sadd.s32 0, 0
    %s110 = smul.u32 %s109, 16
    %s111 = sadd.s32 %s110, 16
    %p112 = scmp.gt.s32.totalorder %s111, 16
    %p113 = scmp.le.s32.totalorder %s111, 16
    // Predicated region
    $region22: #{tpu_custom_call.1} parent=1 // pred_check
      %p114 = pneg %p113
    $region23: #{tpu_custom_call.1} parent=1 // pred_check_branch
      %116 = sbr.rel (%p114) target = $region25
    $region24: #{tpu_custom_call.1} parent=1 // pred_region
      %v117 = vadd.f32 %v107, %v108
      %v118 = vld [vmem:[#allocation7] sm:$0xff]
      %v119 = vadd.f32 %v118, %v117
      %120 = vst [vmem:[#allocation7] sm:$0xff] %v119
    $region25: #{tpu_custom_call.1} parent=1 // pred_fallthru
      _
    // Predicated region
    $region26: #{tpu_custom_call.1} parent=1 // pred_check
      %p121 = pneg %p112
    $region27: #{tpu_custom_call.1} parent=1 // pred_check_branch
      %123 = sbr.rel (%p121) target = $region29
    $region28: #{tpu_custom_call.1} parent=1 // pred_region
      %v124 = vlaneseq
      %v125 = vshrl.u32 %v124, 7
      %v126 = vadd.s32 %v125, 8
      %v127 = vstv %s110
      %v128 = vadd.s32 %v127, %v125
      %v129 = vadd.s32 %v127, %v126
      %v130 = vlaneseq
      %v131 = vand.u32 %v130, 127
      %vm132 = vcmp.lt.s32.totalorder %v128, 16
      %vm133 = vcmp.lt.s32.totalorder %v129, 16
      %vm134 = vcmp.eq.s32.totalorder %v128, 16
      %vm135 = vcmp.eq.s32.totalorder %v129, 16
      %vm136 = vcmp.lt.s32.totalorder %v131, 0
      %vm137 = vmand %vm134, %vm136
      %vm138 = vmand %vm135, %vm136
      %vm139 = vmor %vm132, %vm137
      %vm140 = vmor %vm133, %vm138
      %v141 = vsel %vm139, %v107, 0.0
      %v142 = vsel %vm140, %v108, 0.0
      %v143 = vadd.f32 %v141, %v142
      %v144 = vld [vmem:[#allocation7] sm:$0xff]
      %v145 = vadd.f32 %v144, %v143
      %146 = vst [vmem:[#allocation7] sm:$0xff] %v145
    $region29: #{tpu_custom_call.1} parent=1 // pred_fallthru
      _
    // Predicated region
    $region30: #{tpu_custom_call.1} parent=1 // pred_check
      _
    $region31: #{tpu_custom_call.1} parent=1 // pred_check_branch
      %148 = sbr.rel (0) target = $region33
    $region32: #{tpu_custom_call.1} parent=1 // pred_region
      %s150 = ssub.s32 128, 128
      %151 = vsyncadd [#allocation4], %s150
      %s153 = sshll.u32 [#allocation7], 4
      %s154 = int_to_ptr.vmem [resolvable:$true] %s153
      %156 = dma.vmem_to_hbm [thread:$0]  %s154, 128, %s2, [#allocation4]
    $region33: #{tpu_custom_call.1} parent=1 // pred_fallthru
      _
    // Predicated region
    $region34: #{tpu_custom_call.1} parent=1 // pred_check
      _
    $region35: #{tpu_custom_call.1} parent=1 // pred_check_branch
      %158 = sbr.rel (0) target = $region37
    $region36: #{tpu_custom_call.1} parent=1 // pred_region
      %159 = dma.done [#allocation4], 128
    $region37: #{tpu_custom_call.1} parent=1 // pred_fallthru
      _
    %160 = vsyncpa [#allocation3], 1
    %161 = vsyncpa [#allocation6], 1
    %162 = vsyncpa [#allocation4], 1

</llo_original>
